<compile_context>
chip_gen: v7x
topology: tpu7x:2x2x1
jax: 0.10.0
libtpu: 0.0.40
codegen_flags: <defaults>
</compile_context>

<pallas_src>
import math

import jax
import jax.numpy as jnp
from jax.experimental import pallas as pl
from jax.experimental.pallas import tpu as pltpu


# ----------------------------------------------------------------------------
# Kernel
# ----------------------------------------------------------------------------
def _dqn_kernel(x_ref, w1_ref, b1_ref, wva_ref, bva_ref, wq_ref, bq_ref, q_ref):
    # fc1 + ReLU: bf16 x bf16 -> f32 accumulate (native MXU path).
    h = jnp.dot(x_ref[...].astype(jnp.bfloat16), w1_ref[...],
                preferred_element_type=jnp.float32) + b1_ref[...]
    h = jnp.maximum(h, 0.0)

    # Fused fc_value || fc_advantage (+ ReLU): one [B, hidden] @ [hidden, 512].
    hva = jnp.dot(h.astype(jnp.bfloat16), wva_ref[...],
                  preferred_element_type=jnp.float32) + bva_ref[...]
    hva = jnp.maximum(hva, 0.0)

    # Fused, lane-padded Q head: value + advantage + dueling combine folded into
    # the weights, so output columns 0..action_dim-1 are the final Q values.
    q = jnp.dot(hva.astype(jnp.bfloat16), wq_ref[...],
                preferred_element_type=jnp.float32) + bq_ref[...]
    q_ref[...] = q.astype(q_ref.dtype)


# ----------------------------------------------------------------------------
# Parameter prep: fuse branches, fold dueling mean, pad K/N dims, bf16 weights
# ----------------------------------------------------------------------------
def prepare_params(p, state_dim, action_dim, q_pad=None, state_pad=None):
    """Build the fused/padded bf16 parameter set consumed by the kernel."""
    if q_pad is None:
        q_pad = max(128, ((action_dim + 127) // 128) * 128)
    if state_pad is None:
        state_pad = max(128, ((state_dim + 127) // 128) * 128)

    hidden = p["w1"].shape[1]
    branch = p["wv1"].shape[1]                  # 256 (fixed in the module)
    fused_branch = branch + p["wa1"].shape[1]   # 512

    # Fold the dueling mean into the advantage head (exact, mean is linear):
    #   A_j - mean_k(A_k) = ah @ (wa2[:,j] - mean_col(wa2)) + (ba2[j] - mean(ba2))
    wa2c = p["wa2"] - jnp.mean(p["wa2"], axis=1, keepdims=True)
    ba2c = p["ba2"] - jnp.mean(p["ba2"], axis=1, keepdims=True)

    # fc1 weight zero-padded on the state (K) dim to a lane-dense 128 multiple.
    w1p = jnp.zeros((state_pad, hidden), jnp.float32).at[:state_dim, :].set(p["w1"])

    # Fused first branch layer: [hidden, 512], [1, 512].
    w_va = jnp.concatenate([p["wv1"], p["wa1"]], axis=1)
    b_va = jnp.concatenate([p["bv1"], p["ba1"]], axis=1)

    # Fused Q head: [512, q_pad].  Q_j = vh @ wv2 + bv2 + ah @ wa2c[:,j] + ba2c[j]
    w_q = jnp.zeros((fused_branch, q_pad), jnp.float32)
    w_q = w_q.at[0:branch, 0:action_dim].set(
        jnp.broadcast_to(p["wv2"], (branch, action_dim)))
    w_q = w_q.at[branch:fused_branch, 0:action_dim].set(wa2c)
    b_q = jnp.zeros((1, q_pad), jnp.float32).at[:, 0:action_dim].set(p["bv2"] + ba2c)

    return dict(
        w1=w1p.astype(jnp.bfloat16), b1=p["b1"],
        w_va=w_va.astype(jnp.bfloat16), b_va=b_va,
        w_q=w_q.astype(jnp.bfloat16), b_q=b_q,
        q_pad=q_pad, state_pad=state_pad, state_dim=state_dim,
    )


# ----------------------------------------------------------------------------
# Wrapper
# ----------------------------------------------------------------------------
def _choose_block_b(B):
    """Batch tile: single block for tiny B; otherwise >=2 grid steps (v7x megacore),
    16-row aligned (bf16-out friendly), capped at 512 rows (amortizes per-step
    overhead on v6e/v5e while staying far inside scoped VMEM)."""
    if B <= 8:
        return B
    blk = min(512, -(-B // 2))          # ceil(B / 2), capped
    return max(16, -(-blk // 16) * 16)  # round up to a multiple of 16


def dqn_forward(x, prep, action_dim):
    """Dueling DQN forward. x: [B, state_dim] f32 -> Q: [B, action_dim] f32."""
    B, state_dim = x.shape
    state_pad = prep["state_pad"]
    hidden = prep["w1"].shape[1]
    fused_branch = prep["w_va"].shape[1]   # 512
    q_pad = prep["q_pad"]

    block_b = _choose_block_b(B)
    B_pad = ((B + block_b - 1) // block_b) * block_b
    grid = (B_pad // block_b,)

    # Replay-sized batches: bf16 writeback halves output HBM traffic.
    out_dtype = jnp.bfloat16 if B >= 512 else jnp.float32

    # Zero-pad batch to a tile multiple and state_dim to 128 (lane-dense fc1 K).
    if B_pad != B or state_pad != state_dim:
        x = jnp.pad(x, ((0, B_pad - B), (0, state_pad - state_dim)))

    const = lambda i: (0, 0)                # weights/biases: VMEM-resident
    out_padded = pl.pallas_call(
        _dqn_kernel,
        out_shape=jax.ShapeDtypeStruct((B_pad, q_pad), out_dtype),
        grid_spec=pltpu.PrefetchScalarGridSpec(
            num_scalar_prefetch=0,
            grid=grid,
            in_specs=[
                pl.BlockSpec((block_b, state_pad), lambda i: (i, 0)),    # x
                pl.BlockSpec((state_pad, hidden), const),                # w1 (bf16)
                pl.BlockSpec((1, hidden), const),                        # b1
                pl.BlockSpec((hidden, fused_branch), const),             # w_va (bf16)
                pl.BlockSpec((1, fused_branch), const),                  # b_va
                pl.BlockSpec((fused_branch, q_pad), const),              # w_q (bf16)
                pl.BlockSpec((1, q_pad), const),                         # b_q
            ],
            out_specs=pl.BlockSpec((block_b, q_pad), lambda i: (i, 0)),
        ),
        compiler_params=pltpu.CompilerParams(
            dimension_semantics=("parallel",)),
    )(x, prep["w1"], prep["b1"], prep["w_va"], prep["b_va"],
      prep["w_q"], prep["b_q"])

    # Padded slab -> real Q rows/columns, f32 for downstream TD targets.
    return out_padded[:B, :action_dim].astype(jnp.float32)


# ----------------------------------------------------------------------------
# Init (mirrors PyTorch nn.Linear default init); weights stored [in, out]
# ----------------------------------------------------------------------------
def init_dqn_params(key, state_dim, action_dim, hidden_dim=256):
    def linear(key, fan_in, fan_out):
        kw, kb = jax.random.split(key)
        k = 1.0 / math.sqrt(fan_in)
        w = jax.random.uniform(kw, (fan_in, fan_out), jnp.float32, -k, k)
        b = jax.random.uniform(kb, (1, fan_out), jnp.float32, -k, k)
        return w, b

    k1, k2, k3, k4, k5 = jax.random.split(key, 5)
    w1, b1 = linear(k1, state_dim, hidden_dim)      # fc1
    wv1, bv1 = linear(k2, hidden_dim, 256)          # fc_value
    wv2, bv2 = linear(k3, 256, 1)                   # value
    wa1, ba1 = linear(k4, hidden_dim, 256)          # fc_advantage
    wa2, ba2 = linear(k5, 256, action_dim)          # advantage
    return dict(w1=w1, b1=b1, wv1=wv1, bv1=bv1, wv2=wv2, bv2=bv2,
                wa1=wa1, ba1=ba1, wa2=wa2, ba2=ba2)


# ----------------------------------------------------------------------------
# References
# ----------------------------------------------------------------------------
def _torch_reference(x, p):
    """Exact PyTorch-module math in f32 (un-fused, f32 weights/activations)."""
    h = jnp.maximum(x @ p["w1"] + p["b1"], 0.0)
    vh = jnp.maximum(h @ p["wv1"] + p["bv1"], 0.0)
    V = vh @ p["wv2"] + p["bv2"]
    ah = jnp.maximum(h @ p["wa1"] + p["ba1"], 0.0)
    A = ah @ p["wa2"] + p["ba2"]
    return V + (A - jnp.mean(A, axis=1, keepdims=True))


def _fused_reference(x, prep, action_dim):
    """Same fused math as the kernel (bf16 weights AND bf16 activation casts)."""
    xp = jnp.pad(x, ((0, 0), (0, prep["state_pad"] - x.shape[1])))
    h = jnp.dot(xp.astype(jnp.bfloat16), prep["w1"],
                preferred_element_type=jnp.float32) + prep["b1"]
    h = jnp.maximum(h, 0.0)
    hva = jnp.dot(h.astype(jnp.bfloat16), prep["w_va"],
                  preferred_element_type=jnp.float32) + prep["b_va"]
    hva = jnp.maximum(hva, 0.0)
    q = jnp.dot(hva.astype(jnp.bfloat16), prep["w_q"],
                preferred_element_type=jnp.float32) + prep["b_q"]
    return q[:, :action_dim]


if __name__ == "__main__":
    # Small, Flappy-Bird-like shapes: 12 state features, 2 actions.
    B, state_dim, action_dim, hidden_dim = 8, 12, 2, 32

    key = jax.random.PRNGKey(0)
    kx, kp = jax.random.split(key)
    x = jax.random.normal(kx, (B, state_dim), dtype=jnp.float32)
    params = init_dqn_params(kp, state_dim, action_dim, hidden_dim)
    prep = prepare_params(params, state_dim, action_dim)

    q = dqn_forward(x, prep, action_dim)
    q = jax.block_until_ready(q)
    assert q.shape == (B, action_dim)

    # Tight check: kernel vs. identical fused math (same bf16 weights/activations).
    q_fused = _fused_reference(x, prep, action_dim)
    assert jnp.allclose(q, q_fused, atol=1e-3, rtol=1e-3), "mismatch vs fused reference"

    # Loose check: kernel vs. original PyTorch-semantics f32 forward
    # (difference is only bf16 weight + activation quantization on the MXU path).
    q_torch = _torch_reference(x, params)
    assert jnp.allclose(q, q_torch, atol=1e-1, rtol=0.0), "mismatch vs f32 module reference"

    # TODO(synk): the enable_double_dqn=False path (single output Linear) is not
    # exercised here; only the default dueling head is implemented in the kernel.
    print("KERNEL_OK")
</pallas_src>

<mosaic_0001>
module attributes {stable_mosaic.version = 11 : i64} {
  func.func @_dqn_kernel(%arg0: i32, %arg1: memref<8x128xf32, #tpu.memory_space<vmem>>, %arg2: memref<128x32xbf16, #tpu.memory_space<vmem>>, %arg3: memref<1x32xf32, #tpu.memory_space<vmem>>, %arg4: memref<32x512xbf16, #tpu.memory_space<vmem>>, %arg5: memref<1x512xf32, #tpu.memory_space<vmem>>, %arg6: memref<512x128xbf16, #tpu.memory_space<vmem>>, %arg7: memref<1x128xf32, #tpu.memory_space<vmem>>, %arg8: memref<8x128xf32, #tpu.memory_space<vmem>>) attributes {dimension_semantics = [#tpu.dimension_semantics<parallel>], iteration_bounds = array<i64: 1>, scalar_prefetch = 0 : i64, scratch_operands = 0 : i64, tpu.core_type = #tpu.core_type<tc>, window_params = [{transform_indices = @transform_0, window_bounds = array<i64: 8, 128>}, {pipeline_mode = #tpu.pipeline_mode<synchronous>, transform_indices = @transform_1, window_bounds = array<i64: 128, 32>}, {pipeline_mode = #tpu.pipeline_mode<synchronous>, transform_indices = @transform_2, window_bounds = array<i64: 1, 32>}, {pipeline_mode = #tpu.pipeline_mode<synchronous>, transform_indices = @transform_3, window_bounds = array<i64: 32, 512>}, {pipeline_mode = #tpu.pipeline_mode<synchronous>, transform_indices = @transform_4, window_bounds = array<i64: 1, 512>}, {pipeline_mode = #tpu.pipeline_mode<synchronous>, transform_indices = @transform_5, window_bounds = array<i64: 512, 128>}, {pipeline_mode = #tpu.pipeline_mode<synchronous>, transform_indices = @transform_6, window_bounds = array<i64: 1, 128>}, {transform_indices = @transform_7, window_bounds = array<i64: 8, 128>}]} {
    %c0 = arith.constant 0 : index
    %c0_0 = arith.constant 0 : index
    %0 = vector.load %arg1[%c0, %c0_0] : memref<8x128xf32, #tpu.memory_space<vmem>>, vector<8x128xf32>
    %1 = arith.truncf %0 : vector<8x128xf32> to vector<8x128xbf16>
    %c0_1 = arith.constant 0 : index
    %c0_2 = arith.constant 0 : index
    %2 = vector.load %arg2[%c0_1, %c0_2] : memref<128x32xbf16, #tpu.memory_space<vmem>>, vector<128x32xbf16>
    %cst = arith.constant dense<0.000000e+00> : vector<8x32xf32>
    %3 = tpu.matmul %1, %2, %cst {dimension_numbers = #tpu.dot_dimension_numbers<[1], [0], [0], [1], [0, 0, 1, 1], [], []>} : vector<8x128xbf16>, vector<128x32xbf16>, vector<8x32xf32> -> vector<8x32xf32>
    %c0_3 = arith.constant 0 : index
    %c0_4 = arith.constant 0 : index
    %4 = vector.load %arg3[%c0_3, %c0_4] : memref<1x32xf32, #tpu.memory_space<vmem>>, vector<1x32xf32>
    %5 = vector.broadcast %4 : vector<1x32xf32> to vector<8x32xf32>
    %6 = arith.addf %3, %5 : vector<8x32xf32>
    %cst_5 = arith.constant 0.000000e+00 : f32
    %7 = vector.broadcast %cst_5 : f32 to vector<8x32xf32>
    %8 = arith.maximumf %6, %7 : vector<8x32xf32>
    %9 = arith.truncf %8 : vector<8x32xf32> to vector<8x32xbf16>
    %c0_6 = arith.constant 0 : index
    %c0_7 = arith.constant 0 : index
    %10 = vector.load %arg4[%c0_6, %c0_7] : memref<32x512xbf16, #tpu.memory_space<vmem>>, vector<32x512xbf16>
    %cst_8 = arith.constant dense<0.000000e+00> : vector<8x512xf32>
    %11 = tpu.matmul %9, %10, %cst_8 {dimension_numbers = #tpu.dot_dimension_numbers<[1], [0], [0], [1], [0, 0, 1, 1], [], []>} : vector<8x32xbf16>, vector<32x512xbf16>, vector<8x512xf32> -> vector<8x512xf32>
    %c0_9 = arith.constant 0 : index
    %c0_10 = arith.constant 0 : index
    %12 = vector.load %arg5[%c0_9, %c0_10] : memref<1x512xf32, #tpu.memory_space<vmem>>, vector<1x512xf32>
    %13 = vector.broadcast %12 : vector<1x512xf32> to vector<8x512xf32>
    %14 = arith.addf %11, %13 : vector<8x512xf32>
    %cst_11 = arith.constant 0.000000e+00 : f32
    %15 = vector.broadcast %cst_11 : f32 to vector<8x512xf32>
    %16 = arith.maximumf %14, %15 : vector<8x512xf32>
    %17 = arith.truncf %16 : vector<8x512xf32> to vector<8x512xbf16>
    %c0_12 = arith.constant 0 : index
    %c0_13 = arith.constant 0 : index
    %18 = vector.load %arg6[%c0_12, %c0_13] : memref<512x128xbf16, #tpu.memory_space<vmem>>, vector<512x128xbf16>
    %cst_14 = arith.constant dense<0.000000e+00> : vector<8x128xf32>
    %19 = tpu.matmul %17, %18, %cst_14 {dimension_numbers = #tpu.dot_dimension_numbers<[1], [0], [0], [1], [0, 0, 1, 1], [], []>} : vector<8x512xbf16>, vector<512x128xbf16>, vector<8x128xf32> -> vector<8x128xf32>
    %c0_15 = arith.constant 0 : index
    %c0_16 = arith.constant 0 : index
    %20 = vector.load %arg7[%c0_15, %c0_16] : memref<1x128xf32, #tpu.memory_space<vmem>>, vector<1x128xf32>
    %21 = vector.broadcast %20 : vector<1x128xf32> to vector<8x128xf32>
    %22 = arith.addf %19, %21 : vector<8x128xf32>
    %c0_17 = arith.constant 0 : index
    %c0_18 = arith.constant 0 : index
    %23 = vector.load %arg8[%c0_17, %c0_18] : memref<8x128xf32, #tpu.memory_space<vmem>>, vector<8x128xf32>
    tpu.vector_store %arg8[%c0_17, %c0_18], %22 {strides = array<i32>} : memref<8x128xf32, #tpu.memory_space<vmem>>, vector<8x128xf32>,
    return
  }
  func.func @transform_0(%arg0: i32) -> (i32, i32) {
    %c0_i32 = arith.constant 0 : i32
    %c0_i32_0 = arith.constant 0 : i32
    return %arg0, %c0_i32 : i32, i32
  }
  func.func @transform_1(%arg0: i32) -> (i32, i32) {
    %c0_i32 = arith.constant 0 : i32
    %c0_i32_0 = arith.constant 0 : i32
    %c0_i32_1 = arith.constant 0 : i32
    return %c0_i32, %c0_i32_0 : i32, i32
  }
  func.func @transform_2(%arg0: i32) -> (i32, i32) {
    %c0_i32 = arith.constant 0 : i32
    %c0_i32_0 = arith.constant 0 : i32
    %c0_i32_1 = arith.constant 0 : i32
    return %c0_i32, %c0_i32_0 : i32, i32
  }
  func.func @transform_3(%arg0: i32) -> (i32, i32) {
    %c0_i32 = arith.constant 0 : i32
    %c0_i32_0 = arith.constant 0 : i32
    %c0_i32_1 = arith.constant 0 : i32
    return %c0_i32, %c0_i32_0 : i32, i32
  }
  func.func @transform_4(%arg0: i32) -> (i32, i32) {
    %c0_i32 = arith.constant 0 : i32
    %c0_i32_0 = arith.constant 0 : i32
    %c0_i32_1 = arith.constant 0 : i32
    return %c0_i32, %c0_i32_0 : i32, i32
  }
  func.func @transform_5(%arg0: i32) -> (i32, i32) {
    %c0_i32 = arith.constant 0 : i32
    %c0_i32_0 = arith.constant 0 : i32
    %c0_i32_1 = arith.constant 0 : i32
    return %c0_i32, %c0_i32_0 : i32, i32
  }
  func.func @transform_6(%arg0: i32) -> (i32, i32) {
    %c0_i32 = arith.constant 0 : i32
    %c0_i32_0 = arith.constant 0 : i32
    %c0_i32_1 = arith.constant 0 : i32
    return %c0_i32, %c0_i32_0 : i32, i32
  }
  func.func @transform_7(%arg0: i32) -> (i32, i32) {
    %c0_i32 = arith.constant 0 : i32
    %c0_i32_0 = arith.constant 0 : i32
    return %arg0, %c0_i32 : i32, i32
  }
}

</mosaic_0001>

<llo_original>
// kernel: tpu_custom_call.1
$region0: #{tpu_custom_call.1}
  #allocation0 [shape = 'u32[]', space=smem, size = 0x4, offset = 0x4, fixed_abs, tag = 'smem constant byte address 0x4 - core index']
  #allocation1 [shape = 'u32[144,128]{1,0:T(1,128)}', space=vmem, size = 0x12000, scoped, tag = 'internal scratch']
  %s0 = inlined_call_operand.vmem [shape: f32[8,128], index: 0, kind: input, shape index: {}]
  %s1 = inlined_call_operand.vmem [shape: bf16[128,32], index: 1, kind: input, shape index: {}]
  %s2 = inlined_call_operand.vmem [shape: f32[1,32], index: 2, kind: input, shape index: {}]
  %s3 = inlined_call_operand.vmem [shape: bf16[32,512], index: 3, kind: input, shape index: {}]
  %s4 = inlined_call_operand.vmem [shape: f32[1,512], index: 4, kind: input, shape index: {}]
  %s5 = inlined_call_operand.hbm [shape: bf16[512,128], index: 5, kind: input, shape index: {}]
  %s6 = inlined_call_operand.vmem [shape: f32[1,128], index: 6, kind: input, shape index: {}]
  %s7 = inlined_call_operand.hbm [shape: f32[8,128], index: 7, kind: output, shape index: {}]
  %s8 = sld [smem:[#allocation0]]
  $region42: #{tpu_custom_call.1} parent=0
    _
  %s10 = ssub.s32 1, %s8
  %s11 = scalar_select 0, %s10, %s8
  $region1: #{tpu_custom_call.1} parent=0
    #allocation2 [shape = 'u8[131072]{0}', space=vmem, size = 0x20000, scoped, tag = 'input window, operand 5, single buffered']
    #allocation3 [shape = 's32[1]{0}', space=sflag, size = 0x4, scoped, tag = 'scoped memory for tpu_custom_call.1']
    #allocation4 [shape = 's32[1]{0}', space=sflag, size = 0x4, scoped, tag = 'scoped memory for tpu_custom_call.1']
    #allocation5 [shape = 'u8[4096]{0}', space=vmem, size = 0x1000, scoped, tag = 'output window, operand 0, single buffered']
    %12 = vsyncpa [#allocation3], 0
    %13 = vsyncpa [#allocation4], 0
    // Predicated region
    $region2: #{tpu_custom_call.1} parent=1 // pred_check
      _
    $region3: #{tpu_custom_call.1} parent=1 // pred_check_branch
      %15 = sbr.rel (0) target = $region5
    $region4: #{tpu_custom_call.1} parent=1 // pred_region
      _
    $region5: #{tpu_custom_call.1} parent=1 // pred_fallthru
      _
    // Predicated region
    $region6: #{tpu_custom_call.1} parent=1 // pred_check
      _
    $region7: #{tpu_custom_call.1} parent=1 // pred_check_branch
      %17 = sbr.rel (0) target = $region9
    $region8: #{tpu_custom_call.1} parent=1 // pred_region
      _
    $region9: #{tpu_custom_call.1} parent=1 // pred_fallthru
      _
    // Predicated region
    $region10: #{tpu_custom_call.1} parent=1 // pred_check
      _
    $region11: #{tpu_custom_call.1} parent=1 // pred_check_branch
      %19 = sbr.rel (0) target = $region13
    $region12: #{tpu_custom_call.1} parent=1 // pred_region
      _
    $region13: #{tpu_custom_call.1} parent=1 // pred_fallthru
      _
    // Predicated region
    $region14: #{tpu_custom_call.1} parent=1 // pred_check
      _
    $region15: #{tpu_custom_call.1} parent=1 // pred_check_branch
      %21 = sbr.rel (0) target = $region17
    $region16: #{tpu_custom_call.1} parent=1 // pred_region
      _
    $region17: #{tpu_custom_call.1} parent=1 // pred_fallthru
      _
    // Predicated region
    $region18: #{tpu_custom_call.1} parent=1 // pred_check
      _
    $region19: #{tpu_custom_call.1} parent=1 // pred_check_branch
      %23 = sbr.rel (0) target = $region21
    $region20: #{tpu_custom_call.1} parent=1 // pred_region
      _
    $region21: #{tpu_custom_call.1} parent=1 // pred_fallthru
      _
    // Predicated region
    $region22: #{tpu_custom_call.1} parent=1 // pred_check
      _
    $region23: #{tpu_custom_call.1} parent=1 // pred_check_branch
      %25 = sbr.rel (0) target = $region25
    $region24: #{tpu_custom_call.1} parent=1 // pred_region
      %s27 = ssub.s32 4096, 4096
      %28 = vsyncadd [#allocation3], %s27
      %s29 = sshll.u32 [#allocation2], 4
      %s30 = int_to_ptr.vmem [resolvable:$true] %s29
      %35 = dma.hbm_to_vmem [thread:$0]  %s5, 4096, %s30, [#allocation3], 64, 64, 4
    $region25: #{tpu_custom_call.1} parent=1 // pred_fallthru
      _
    // Predicated region
    $region26: #{tpu_custom_call.1} parent=1 // pred_check
      _
    $region27: #{tpu_custom_call.1} parent=1 // pred_check_branch
      %37 = sbr.rel (0) target = $region29
    $region28: #{tpu_custom_call.1} parent=1 // pred_region
      _
    $region29: #{tpu_custom_call.1} parent=1 // pred_fallthru
      _
    // Predicated region
    $region30: #{tpu_custom_call.1} parent=1 // pred_check
      _
    $region31: #{tpu_custom_call.1} parent=1 // pred_check_branch
      %39 = sbr.rel (0) target = $region33
    $region32: #{tpu_custom_call.1} parent=1 // pred_region
      %40 = dma.done [#allocation3], 4096
    $region33: #{tpu_custom_call.1} parent=1 // pred_fallthru
      _
    %v42 = vld [vmem:[%s0] sm:$0xff]
    %v43 = vpack.c.bf16 %v42, %v42
    %v44 = vld [vmem:[%s1] sm:$0xf]
    %v45 = vld [vmem:[%s1 + $0x4] sm:$0xf]
    %v46 = vld [vmem:[%s1 + $0x8] sm:$0xf]
    %v47 = vld [vmem:[%s1 + $0xc] sm:$0xf]
    %v48 = vld [vmem:[%s1 + $0x10] sm:$0xf]
    %v49 = vld [vmem:[%s1 + $0x14] sm:$0xf]
    %v50 = vld [vmem:[%s1 + $0x18] sm:$0xf]
    %v51 = vld [vmem:[%s1 + $0x1c] sm:$0xf]
    %v52 = vld [vmem:[%s1 + $0x20] sm:$0xf]
    %v53 = vld [vmem:[%s1 + $0x24] sm:$0xf]
    %v54 = vld [vmem:[%s1 + $0x28] sm:$0xf]
    %v55 = vld [vmem:[%s1 + $0x2c] sm:$0xf]
    %v56 = vld [vmem:[%s1 + $0x30] sm:$0xf]
    %v57 = vld [vmem:[%s1 + $0x34] sm:$0xf]
    %v58 = vld [vmem:[%s1 + $0x38] sm:$0xf]
    %v59 = vld [vmem:[%s1 + $0x3c] sm:$0xf]
    %v60 = vld [vmem:[%s2] sm:$0x1]
    %v62 = vlaneseq
    %v63 = vshrl.u32 %v62, 7
    %v64 = vsub.s32 0, %v63
    %v65 = vrot.slane %v60, %v64
    %v83 = vunpack.c.l.b16 %v44
    %v84 = vunpack.c.l.b16 %v45
    %v85 = vunpack.c.l.b16 %v46
    %v86 = vunpack.c.l.b16 %v47
    %v87 = vunpack.c.l.b16 %v48
    %v88 = vunpack.c.l.b16 %v49
    %v89 = vunpack.c.l.b16 %v50
    %v90 = vunpack.c.l.b16 %v51
    %v91 = vunpack.c.l.b16 %v52
    %v92 = vunpack.c.l.b16 %v53
    %v93 = vunpack.c.l.b16 %v54
    %v94 = vunpack.c.l.b16 %v55
    %v95 = vunpack.c.l.b16 %v56
    %v96 = vunpack.c.l.b16 %v57
    %v97 = vunpack.c.l.b16 %v58
    %v98 = vunpack.c.l.b16 %v59
    %v99 = vpack.c.b16 %v84, %v83
    %v100 = vpack.c.b16 %v86, %v85
    %v101 = vpack.c.b16 %v88, %v87
    %v102 = vpack.c.b16 %v90, %v89
    %v103 = vpack.c.b16 %v92, %v91
    %v104 = vpack.c.b16 %v94, %v93
    %v105 = vpack.c.b16 %v96, %v95
    %v106 = vpack.c.b16 %v98, %v97
    %115 = vmatprep.subr.bf16.mxu0 0
    %116 = vmatpush1.bf16.msra.mxu0 %v99
    %117 = vmatprep.subr.bf16.mxu0 0
    %118 = vmatpush1.bf16.msra.mxu0 %v100
    %119 = vmatprep.subr.bf16.mxu0 0
    %120 = vmatpush1.bf16.msra.mxu0 %v101
    %121 = vmatprep.subr.bf16.mxu0 0
    %122 = vmatpush1.bf16.msra.mxu0 %v102
    %123 = vmatprep.subr.bf16.mxu0 0
    %124 = vmatpush1.bf16.msra.mxu0 %v103
    %125 = vmatprep.subr.bf16.mxu0 0
    %126 = vmatpush1.bf16.msra.mxu0 %v104
    %127 = vmatprep.subr.bf16.mxu0 0
    %128 = vmatpush1.bf16.msra.mxu0 %v105
    %129 = vmatprep.subr.bf16.mxu0 0
    %130 = vmatpush1.bf16.msra.mxu0 %v106
    %131 = vmatprep.subr.bf16.mxu0 0
    %132 = vmatpush1.bf16.msra.mxu0 0
    %133 = vmatprep.subr.bf16.mxu0 0
    %134 = vmatpush1.bf16.msra.mxu0 0
    %135 = vmatprep.subr.bf16.mxu0 0
    %136 = vmatpush1.bf16.msra.mxu0 0
    %137 = vmatprep.subr.bf16.mxu0 0
    %138 = vmatpush1.bf16.msra.mxu0 0
    %139 = vmatprep.subr.bf16.mxu0 0
    %140 = vmatpush1.bf16.msra.mxu0 0
    %141 = vmatprep.subr.bf16.mxu0 0
    %142 = vmatpush1.bf16.msra.mxu0 0
    %143 = vmatprep.subr.bf16.mxu0 0
    %144 = vmatpush1.bf16.msra.mxu0 0
    %145 = vmatprep.subr.bf16.mxu0 0
    %146 = vmatpush1.bf16.msra.mxu0 0
    %147 = vmatprep.mubr.bf16.mxu0 0
    %148 = vmatmul.mubr.bf16.gmra.mrb[0].mxu0 %v43
    %v149 = vpop.f32.mrb[0].mxu0
    %v150 = vadd.f32 %v65, %v149
    %v151 = vpop.f32.mrb[0].mxu0
    %v152 = vpop.f32.mrb[0].mxu0
    %v153 = vpop.f32.mrb[0].mxu0
    %154 = vdwg.mxu0
    %v155 = vmax.f32 %v150, 0.0
    %v156 = vpack.c.bf16 %v155, %v155
    %v157 = vld [vmem:[%s3] sm:$0xff]
    %v158 = vld [vmem:[%s3 + $0x8] sm:$0xff]
    %v159 = vld [vmem:[%s3 + $0x10] sm:$0xff]
    %v160 = vld [vmem:[%s3 + $0x18] sm:$0xff]
    %v161 = vld [vmem:[%s3 + $0x20] sm:$0xff]
    %v162 = vld [vmem:[%s3 + $0x28] sm:$0xff]
    %v163 = vld [vmem:[%s3 + $0x30] sm:$0xff]
    %v164 = vld [vmem:[%s3 + $0x38] sm:$0xff]
    %v165 = vld [vmem:[%s4] sm:$0xf]
    %v167 = vlaneseq
    %v168 = vshrl.u32 %v167, 7
    %v169 = vsub.s32 0, %v168
    %v170 = vrot.slane %v165, %v169
    %v171 = vlaneseq
    %v172 = vshrl.u32 %v171, 7
    %v173 = vsub.s32 1, %v172
    %v174 = vrot.slane %v165, %v173
    %v175 = vlaneseq
    %v176 = vshrl.u32 %v175, 7
    %v177 = vsub.s32 2, %v176
    %v178 = vrot.slane %v165, %v177
    %v179 = vlaneseq
    %v180 = vshrl.u32 %v179, 7
    %v181 = vsub.s32 3, %v180
    %v182 = vrot.slane %v165, %v181
    %v195 = vunpack.c.l.b16 %v157
    %v196 = vunpack.c.h.b16 %v157
    %v197 = vunpack.c.l.b16 %v158
    %v198 = vunpack.c.h.b16 %v158
    %v199 = vunpack.c.l.b16 %v159
    %v200 = vunpack.c.h.b16 %v159
    %v201 = vunpack.c.l.b16 %v160
    %v202 = vunpack.c.h.b16 %v160
    %v203 = vunpack.c.l.b16 %v161
    %v204 = vunpack.c.h.b16 %v161
    %v205 = vunpack.c.l.b16 %v162
    %v206 = vunpack.c.h.b16 %v162
    %v207 = vunpack.c.l.b16 %v163
    %v208 = vunpack.c.h.b16 %v163
    %v209 = vunpack.c.l.b16 %v164
    %v210 = vunpack.c.h.b16 %v164
    %v211 = vpack.c.b16 %v199, %v195
    %v212 = vpack.c.b16 %v200, %v196
    %v213 = vpack.c.b16 %v201, %v197
    %v214 = vpack.c.b16 %v202, %v198
    %v215 = vpack.c.b16 %v207, %v203
    %v216 = vpack.c.b16 %v208, %v204
    %v217 = vpack.c.b16 %v209, %v205
    %v218 = vpack.c.b16 %v210, %v206
    %vm227 = vcmask 261120
    %v229 = vsel %vm227, %v156, 0
    %231 = vmatprep.subr.bf16.mxu0 %v212
    %232 = vmatpush1.bf16.msra.mxu0 %v211
    %233 = vmatprep.subr.bf16.mxu0 %v216
    %234 = vmatpush1.bf16.msra.mxu0 %v215
    %235 = vmatprep.subr.bf16.mxu0 0
    %236 = vmatpush1.bf16.msra.mxu0 0
    %237 = vmatprep.subr.bf16.mxu0 0
    %238 = vmatpush1.bf16.msra.mxu0 0
    %239 = vmatprep.subr.bf16.mxu0 0
    %240 = vmatpush1.bf16.msra.mxu0 0
    %241 = vmatprep.subr.bf16.mxu0 0
    %242 = vmatpush1.bf16.msra.mxu0 0
    %243 = vmatprep.subr.bf16.mxu0 0
    %244 = vmatpush1.bf16.msra.mxu0 0
    %245 = vmatprep.subr.bf16.mxu0 0
    %246 = vmatpush1.bf16.msra.mxu0 0
    %247 = vmatprep.subr.bf16.mxu0 0
    %248 = vmatpush1.bf16.msra.mxu0 0
    %249 = vmatprep.subr.bf16.mxu0 0
    %250 = vmatpush1.bf16.msra.mxu0 0
    %251 = vmatprep.subr.bf16.mxu0 0
    %252 = vmatpush1.bf16.msra.mxu0 0
    %253 = vmatprep.subr.bf16.mxu0 0
    %254 = vmatpush1.bf16.msra.mxu0 0
    %255 = vmatprep.subr.bf16.mxu0 0
    %256 = vmatpush1.bf16.msra.mxu0 0
    %257 = vmatprep.subr.bf16.mxu0 0
    %258 = vmatpush1.bf16.msra.mxu0 0
    %259 = vmatprep.subr.bf16.mxu0 0
    %260 = vmatpush1.bf16.msra.mxu0 0
    %261 = vmatprep.subr.bf16.mxu0 0
    %262 = vmatpush1.bf16.msra.mxu0 0
    %263 = vmatprep.mubr.bf16.mxu0 0
    %264 = vmatmul.mubr.bf16.gmra.mrb[0].mxu0 %v229
    %v265 = vpop.f32.mrb[0].mxu0
    %v266 = vadd.f32 %v170, %v265
    %v267 = vpop.f32.mrb[0].mxu0
    %v268 = vadd.f32 %v174, %v267
    %v269 = vpop.f32.mrb[0].mxu0
    %v270 = vpop.f32.mrb[0].mxu0
    %271 = vdwg.mxu0
    %272 = vmatprep.subr.bf16.mxu0 %v214
    %273 = vmatpush1.bf16.msra.mxu0 %v213
    %274 = vmatprep.subr.bf16.mxu0 %v218
    %275 = vmatpush1.bf16.msra.mxu0 %v217
    %276 = vmatprep.subr.bf16.mxu0 0
    %277 = vmatpush1.bf16.msra.mxu0 0
    %278 = vmatprep.subr.bf16.mxu0 0
    %279 = vmatpush1.bf16.msra.mxu0 0
    %280 = vmatprep.subr.bf16.mxu0 0
    %281 = vmatpush1.bf16.msra.mxu0 0
    %282 = vmatprep.subr.bf16.mxu0 0
    %283 = vmatpush1.bf16.msra.mxu0 0
    %284 = vmatprep.subr.bf16.mxu0 0
    %285 = vmatpush1.bf16.msra.mxu0 0
    %286 = vmatprep.subr.bf16.mxu0 0
    %287 = vmatpush1.bf16.msra.mxu0 0
    %288 = vmatprep.subr.bf16.mxu0 0
    %289 = vmatpush1.bf16.msra.mxu0 0
    %290 = vmatprep.subr.bf16.mxu0 0
    %291 = vmatpush1.bf16.msra.mxu0 0
    %292 = vmatprep.subr.bf16.mxu0 0
    %293 = vmatpush1.bf16.msra.mxu0 0
    %294 = vmatprep.subr.bf16.mxu0 0
    %295 = vmatpush1.bf16.msra.mxu0 0
    %296 = vmatprep.subr.bf16.mxu0 0
    %297 = vmatpush1.bf16.msra.mxu0 0
    %298 = vmatprep.subr.bf16.mxu0 0
    %299 = vmatpush1.bf16.msra.mxu0 0
    %300 = vmatprep.subr.bf16.mxu0 0
    %301 = vmatpush1.bf16.msra.mxu0 0
    %302 = vmatprep.subr.bf16.mxu0 0
    %303 = vmatpush1.bf16.msra.mxu0 0
    %304 = vmatprep.mubr.bf16.mxu0 0
    %305 = vmatmul.mubr.bf16.gmra.mrb[0].mxu0 %v229
    %v306 = vpop.f32.mrb[0].mxu0
    %v307 = vadd.f32 %v178, %v306
    %v308 = vpop.f32.mrb[0].mxu0
    %v309 = vadd.f32 %v182, %v308
    %v310 = vpop.f32.mrb[0].mxu0
    %v311 = vpop.f32.mrb[0].mxu0
    %312 = vdwg.mxu0
    %v313 = vmax.f32 %v266, 0.0
    %v314 = vmax.f32 %v268, 0.0
    %v315 = vmax.f32 %v307, 0.0
    %v316 = vmax.f32 %v309, 0.0
    %v317 = vpack.c.bf16 %v313, %v313
    %v318 = vpack.c.bf16 %v314, %v314
    %v319 = vpack.c.bf16 %v315, %v315
    %v320 = vpack.c.bf16 %v316, %v316
    %v321 = vld [vmem:[#allocation2] sm:$0xf]
    %v322 = vld [vmem:[#allocation2 + $0x4] sm:$0xf]
    %v323 = vld [vmem:[#allocation2 + $0x8] sm:$0xf]
    %v324 = vld [vmem:[#allocation2 + $0xc] sm:$0xf]
    %v325 = vld [vmem:[#allocation2 + $0x10] sm:$0xf]
    %v326 = vld [vmem:[#allocation2 + $0x14] sm:$0xf]
    %v327 = vld [vmem:[#allocation2 + $0x18] sm:$0xf]
    %v328 = vld [vmem:[#allocation2 + $0x1c] sm:$0xf]
    %v329 = vld [vmem:[#allocation2 + $0x20] sm:$0xf]
    %v330 = vld [vmem:[#allocation2 + $0x24] sm:$0xf]
    %v331 = vld [vmem:[#allocation2 + $0x28] sm:$0xf]
    %v332 = vld [vmem:[#allocation2 + $0x2c] sm:$0xf]
    %v333 = vld [vmem:[#allocation2 + $0x30] sm:$0xf]
    %v334 = vld [vmem:[#allocation2 + $0x34] sm:$0xf]
    %v335 = vld [vmem:[#allocation2 + $0x38] sm:$0xf]
    %v336 = vld [vmem:[#allocation2 + $0x3c] sm:$0xf]
    %v337 = vld [vmem:[#allocation2 + $0x40] sm:$0xf]
    %v338 = vld [vmem:[#allocation2 + $0x44] sm:$0xf]
    %v339 = vld [vmem:[#allocation2 + $0x48] sm:$0xf]
    %v340 = vld [vmem:[#allocation2 + $0x4c] sm:$0xf]
    %v341 = vld [vmem:[#allocation2 + $0x50] sm:$0xf]
    %v342 = vld [vmem:[#allocation2 + $0x54] sm:$0xf]
    %v343 = vld [vmem:[#allocation2 + $0x58] sm:$0xf]
    %v344 = vld [vmem:[#allocation2 + $0x5c] sm:$0xf]
    %v345 = vld [vmem:[#allocation2 + $0x60] sm:$0xf]
    %v346 = vld [vmem:[#allocation2 + $0x64] sm:$0xf]
    %v347 = vld [vmem:[#allocation2 + $0x68] sm:$0xf]
    %v348 = vld [vmem:[#allocation2 + $0x6c] sm:$0xf]
    %v349 = vld [vmem:[#allocation2 + $0x70] sm:$0xf]
    %v350 = vld [vmem:[#allocation2 + $0x74] sm:$0xf]
    %v351 = vld [vmem:[#allocation2 + $0x78] sm:$0xf]
    %v352 = vld [vmem:[#allocation2 + $0x7c] sm:$0xf]
    %v353 = vld [vmem:[#allocation2 + $0x80] sm:$0xf]
    %v354 = vld [vmem:[#allocation2 + $0x84] sm:$0xf]
    %v355 = vld [vmem:[#allocation2 + $0x88] sm:$0xf]
    %v356 = vld [vmem:[#allocation2 + $0x8c] sm:$0xf]
    %v357 = vld [vmem:[#allocation2 + $0x90] sm:$0xf]
    %v358 = vld [vmem:[#allocation2 + $0x94] sm:$0xf]
    %v359 = vld [vmem:[#allocation2 + $0x98] sm:$0xf]
    %v360 = vld [vmem:[#allocation2 + $0x9c] sm:$0xf]
    %v361 = vld [vmem:[#allocation2 + $0xa0] sm:$0xf]
    %v362 = vld [vmem:[#allocation2 + $0xa4] sm:$0xf]
    %v363 = vld [vmem:[#allocation2 + $0xa8] sm:$0xf]
    %v364 = vld [vmem:[#allocation2 + $0xac] sm:$0xf]
    %v365 = vld [vmem:[#allocation2 + $0xb0] sm:$0xf]
    %v366 = vld [vmem:[#allocation2 + $0xb4] sm:$0xf]
    %v367 = vld [vmem:[#allocation2 + $0xb8] sm:$0xf]
    %v368 = vld [vmem:[#allocation2 + $0xbc] sm:$0xf]
    %v369 = vld [vmem:[#allocation2 + $0xc0] sm:$0xf]
    %v370 = vld [vmem:[#allocation2 + $0xc4] sm:$0xf]
    %v371 = vld [vmem:[#allocation2 + $0xc8] sm:$0xf]
    %v372 = vld [vmem:[#allocation2 + $0xcc] sm:$0xf]
    %v373 = vld [vmem:[#allocation2 + $0xd0] sm:$0xf]
    %v374 = vld [vmem:[#allocation2 + $0xd4] sm:$0xf]
    %v375 = vld [vmem:[#allocation2 + $0xd8] sm:$0xf]
    %v376 = vld [vmem:[#allocation2 + $0xdc] sm:$0xf]
    %v377 = vld [vmem:[#allocation2 + $0xe0] sm:$0xf]
    %v378 = vld [vmem:[#allocation2 + $0xe4] sm:$0xf]
    %v379 = vld [vmem:[#allocation2 + $0xe8] sm:$0xf]
    %v380 = vld [vmem:[#allocation2 + $0xec] sm:$0xf]
    %v381 = vld [vmem:[#allocation2 + $0xf0] sm:$0xf]
    %v382 = vld [vmem:[#allocation2 + $0xf4] sm:$0xf]
    %v383 = vld [vmem:[#allocation2 + $0xf8] sm:$0xf]
    %v384 = vld [vmem:[#allocation2 + $0xfc] sm:$0xf]
    %v385 = vld [vmem:[%s6] sm:$0x1]
    %v387 = vlaneseq
    %v388 = vshrl.u32 %v387, 7
    %v389 = vsub.s32 0, %v388
    %v390 = vrot.slane %v385, %v389
    %v456 = vunpack.c.l.b16 %v321
    %v457 = vunpack.c.l.b16 %v322
    %v458 = vunpack.c.l.b16 %v323
    %v459 = vunpack.c.l.b16 %v324
    %v460 = vunpack.c.l.b16 %v325
    %v461 = vunpack.c.l.b16 %v326
    %v462 = vunpack.c.l.b16 %v327
    %v463 = vunpack.c.l.b16 %v328
    %v464 = vunpack.c.l.b16 %v329
    %v465 = vunpack.c.l.b16 %v330
    %v466 = vunpack.c.l.b16 %v331
    %v467 = vunpack.c.l.b16 %v332
    %v468 = vunpack.c.l.b16 %v333
    %v469 = vunpack.c.l.b16 %v334
    %v470 = vunpack.c.l.b16 %v335
    %v471 = vunpack.c.l.b16 %v336
    %v472 = vunpack.c.l.b16 %v337
    %v473 = vunpack.c.l.b16 %v338
    %v474 = vunpack.c.l.b16 %v339
    %v475 = vunpack.c.l.b16 %v340
    %v476 = vunpack.c.l.b16 %v341
    %v477 = vunpack.c.l.b16 %v342
    %v478 = vunpack.c.l.b16 %v343
    %v479 = vunpack.c.l.b16 %v344
    %v480 = vunpack.c.l.b16 %v345
    %v481 = vunpack.c.l.b16 %v346
    %v482 = vunpack.c.l.b16 %v347
    %v483 = vunpack.c.l.b16 %v348
    %v484 = vunpack.c.l.b16 %v349
    %v485 = vunpack.c.l.b16 %v350
    %v486 = vunpack.c.l.b16 %v351
    %v487 = vunpack.c.l.b16 %v352
    %v488 = vunpack.c.l.b16 %v353
    %v489 = vunpack.c.l.b16 %v354
    %v490 = vunpack.c.l.b16 %v355
    %v491 = vunpack.c.l.b16 %v356
    %v492 = vunpack.c.l.b16 %v357
    %v493 = vunpack.c.l.b16 %v358
    %v494 = vunpack.c.l.b16 %v359
    %v495 = vunpack.c.l.b16 %v360
    %v496 = vunpack.c.l.b16 %v361
    %v497 = vunpack.c.l.b16 %v362
    %v498 = vunpack.c.l.b16 %v363
    %v499 = vunpack.c.l.b16 %v364
    %v500 = vunpack.c.l.b16 %v365
    %v501 = vunpack.c.l.b16 %v366
    %v502 = vunpack.c.l.b16 %v367
    %v503 = vunpack.c.l.b16 %v368
    %v504 = vunpack.c.l.b16 %v369
    %v505 = vunpack.c.l.b16 %v370
    %v506 = vunpack.c.l.b16 %v371
    %v507 = vunpack.c.l.b16 %v372
    %v508 = vunpack.c.l.b16 %v373
    %v509 = vunpack.c.l.b16 %v374
    %v510 = vunpack.c.l.b16 %v375
    %v511 = vunpack.c.l.b16 %v376
    %v512 = vunpack.c.l.b16 %v377
    %v513 = vunpack.c.l.b16 %v378
    %v514 = vunpack.c.l.b16 %v379
    %v515 = vunpack.c.l.b16 %v380
    %v516 = vunpack.c.l.b16 %v381
    %v517 = vunpack.c.l.b16 %v382
    %v518 = vunpack.c.l.b16 %v383
    %v519 = vunpack.c.l.b16 %v384
    %v520 = vpack.c.b16 %v457, %v456
    %v521 = vpack.c.b16 %v459, %v458
    %v522 = vpack.c.b16 %v461, %v460
    %v523 = vpack.c.b16 %v463, %v462
    %v524 = vpack.c.b16 %v465, %v464
    %v525 = vpack.c.b16 %v467, %v466
    %v526 = vpack.c.b16 %v469, %v468
    %v527 = vpack.c.b16 %v471, %v470
    %v528 = vpack.c.b16 %v473, %v472
    %v529 = vpack.c.b16 %v475, %v474
    %v530 = vpack.c.b16 %v477, %v476
    %v531 = vpack.c.b16 %v479, %v478
    %v532 = vpack.c.b16 %v481, %v480
    %v533 = vpack.c.b16 %v483, %v482
    %v534 = vpack.c.b16 %v485, %v484
    %v535 = vpack.c.b16 %v487, %v486
    %v536 = vpack.c.b16 %v489, %v488
    %v537 = vpack.c.b16 %v491, %v490
    %v538 = vpack.c.b16 %v493, %v492
    %v539 = vpack.c.b16 %v495, %v494
    %v540 = vpack.c.b16 %v497, %v496
    %v541 = vpack.c.b16 %v499, %v498
    %v542 = vpack.c.b16 %v501, %v500
    %v543 = vpack.c.b16 %v503, %v502
    %v544 = vpack.c.b16 %v505, %v504
    %v545 = vpack.c.b16 %v507, %v506
    %v546 = vpack.c.b16 %v509, %v508
    %v547 = vpack.c.b16 %v511, %v510
    %v548 = vpack.c.b16 %v513, %v512
    %v549 = vpack.c.b16 %v515, %v514
    %v550 = vpack.c.b16 %v517, %v516
    %v551 = vpack.c.b16 %v519, %v518
    %584 = vmatprep.subr.bf16.mxu0 0
    %585 = vmatpush1.bf16.msra.mxu0 %v520
    %586 = vmatprep.subr.bf16.mxu0 0
    %587 = vmatpush1.bf16.msra.mxu0 %v521
    %588 = vmatprep.subr.bf16.mxu0 0
    %589 = vmatpush1.bf16.msra.mxu0 %v522
    %590 = vmatprep.subr.bf16.mxu0 0
    %591 = vmatpush1.bf16.msra.mxu0 %v523
    %592 = vmatprep.subr.bf16.mxu0 0
    %593 = vmatpush1.bf16.msra.mxu0 %v524
    %594 = vmatprep.subr.bf16.mxu0 0
    %595 = vmatpush1.bf16.msra.mxu0 %v525
    %596 = vmatprep.subr.bf16.mxu0 0
    %597 = vmatpush1.bf16.msra.mxu0 %v526
    %598 = vmatprep.subr.bf16.mxu0 0
    %599 = vmatpush1.bf16.msra.mxu0 %v527
    %600 = vmatprep.subr.bf16.mxu0 0
    %601 = vmatpush1.bf16.msra.mxu0 %v528
    %602 = vmatprep.subr.bf16.mxu0 0
    %603 = vmatpush1.bf16.msra.mxu0 %v529
    %604 = vmatprep.subr.bf16.mxu0 0
    %605 = vmatpush1.bf16.msra.mxu0 %v530
    %606 = vmatprep.subr.bf16.mxu0 0
    %607 = vmatpush1.bf16.msra.mxu0 %v531
    %608 = vmatprep.subr.bf16.mxu0 0
    %609 = vmatpush1.bf16.msra.mxu0 %v532
    %610 = vmatprep.subr.bf16.mxu0 0
    %611 = vmatpush1.bf16.msra.mxu0 %v533
    %612 = vmatprep.subr.bf16.mxu0 0
    %613 = vmatpush1.bf16.msra.mxu0 %v534
    %614 = vmatprep.subr.bf16.mxu0 0
    %615 = vmatpush1.bf16.msra.mxu0 %v535
    %616 = vmatprep.mubr.bf16.mxu0 %v318
    %617 = vmatmul.mubr.bf16.gmra.mrb[0].mxu0 %v317
    %v618 = vpop.f32.mrb[0].mxu0
    %v619 = vadd.f32 %v390, %v618
    %v620 = vpop.f32.mrb[0].mxu0
    %v621 = vpop.f32.mrb[0].mxu0
    %v622 = vpop.f32.mrb[0].mxu0
    %623 = vdwg.mxu0
    %624 = vmatprep.subr.bf16.mxu0 0
    %625 = vmatpush1.bf16.msra.mxu0 %v536
    %626 = vmatprep.subr.bf16.mxu0 0
    %627 = vmatpush1.bf16.msra.mxu0 %v537
    %628 = vmatprep.subr.bf16.mxu0 0
    %629 = vmatpush1.bf16.msra.mxu0 %v538
    %630 = vmatprep.subr.bf16.mxu0 0
    %631 = vmatpush1.bf16.msra.mxu0 %v539
    %632 = vmatprep.subr.bf16.mxu0 0
    %633 = vmatpush1.bf16.msra.mxu0 %v540
    %634 = vmatprep.subr.bf16.mxu0 0
    %635 = vmatpush1.bf16.msra.mxu0 %v541
    %636 = vmatprep.subr.bf16.mxu0 0
    %637 = vmatpush1.bf16.msra.mxu0 %v542
    %638 = vmatprep.subr.bf16.mxu0 0
    %639 = vmatpush1.bf16.msra.mxu0 %v543
    %640 = vmatprep.subr.bf16.mxu0 0
    %641 = vmatpush1.bf16.msra.mxu0 %v544
    %642 = vmatprep.subr.bf16.mxu0 0
    %643 = vmatpush1.bf16.msra.mxu0 %v545
    %644 = vmatprep.subr.bf16.mxu0 0
    %645 = vmatpush1.bf16.msra.mxu0 %v546
    %646 = vmatprep.subr.bf16.mxu0 0
    %647 = vmatpush1.bf16.msra.mxu0 %v547
    %648 = vmatprep.subr.bf16.mxu0 0
    %649 = vmatpush1.bf16.msra.mxu0 %v548
    %650 = vmatprep.subr.bf16.mxu0 0
    %651 = vmatpush1.bf16.msra.mxu0 %v549
    %652 = vmatprep.subr.bf16.mxu0 0
    %653 = vmatpush1.bf16.msra.mxu0 %v550
    %654 = vmatprep.subr.bf16.mxu0 0
    %655 = vmatpush1.bf16.msra.mxu0 %v551
    %656 = vmatprep.mubr.bf16.mxu0 %v320
    %657 = vmatmul.mubr.bf16.gmra.mrb[0].mxu0 %v319
    %v658 = vpop.f32.mrb[0].mxu0
    %v659 = vadd.f32 %v619, %v658
    %v660 = vpop.f32.mrb[0].mxu0
    %v661 = vpop.f32.mrb[0].mxu0
    %v662 = vpop.f32.mrb[0].mxu0
    %663 = vdwg.mxu0
    %664 = vst [vmem:[#allocation5] sm:$0xff] %v659
    // Predicated region
    $region34: #{tpu_custom_call.1} parent=1 // pred_check
      _
    $region35: #{tpu_custom_call.1} parent=1 // pred_check_branch
      %666 = sbr.rel (0) target = $region37
    $region36: #{tpu_custom_call.1} parent=1 // pred_region
      %s668 = ssub.s32 128, 128
      %669 = vsyncadd [#allocation4], %s668
      %s671 = sshll.u32 [#allocation5], 4
      %s672 = int_to_ptr.vmem [resolvable:$true] %s671
      %674 = dma.vmem_to_hbm [thread:$0]  %s672, 128, %s7, [#allocation4]
    $region37: #{tpu_custom_call.1} parent=1 // pred_fallthru
      _
    // Predicated region
    $region38: #{tpu_custom_call.1} parent=1 // pred_check
      _
    $region39: #{tpu_custom_call.1} parent=1 // pred_check_branch
      %676 = sbr.rel (0) target = $region41
    $region40: #{tpu_custom_call.1} parent=1 // pred_region
      %677 = dma.done [#allocation4], 128
    $region41: #{tpu_custom_call.1} parent=1 // pred_fallthru
      _
    %678 = vsyncpa [#allocation3], 1
    %679 = vsyncpa [#allocation4], 1

</llo_original>
